<compile_context>
chip_gen: v7x
topology: tpu7x:2x2x1
jax: 0.10.0
libtpu: 0.0.40
codegen_flags: <defaults>
</compile_context>

<pallas_src>
import numpy as np
import jax
import jax.numpy as jnp
from jax import lax
from jax.experimental import pallas as pl
from jax.experimental.pallas import tpu as pltpu


# ---------------------------------------------------------------------------
# One-time host-side preparation of all kernel constants
# ---------------------------------------------------------------------------

def prepare_params(p, N, H, W):
    bf16, f32 = jnp.bfloat16, jnp.float32
    H1, W1, H2, W2 = H // 2, W // 2, H // 4, W // 4
    M1, M2 = N * H1 * W1, N * H2 * W2

    c1w = np.asarray(p['conv1_w'], np.float32)   # (16, 1, 3, 3)
    c1b = np.asarray(p['conv1_b'], np.float32)   # (16,)
    c2w = np.asarray(p['conv2_w'], np.float32)   # (4, 16, 3, 3)
    c2b = np.asarray(p['conv2_b'], np.float32)   # (4,)
    t1w = np.asarray(p['tconv1_w'], np.float32)  # (4, 16, 2, 2)   (Cin, Cout, kh, kw)
    t1b = np.asarray(p['tconv1_b'], np.float32)  # (16,)
    t2w = np.asarray(p['tconv2_w'], np.float32)  # (16, 1, 2, 2)
    t2b = np.asarray(p['tconv2_b'], np.float32)  # (1,)

    C1 = c1w.shape[0]          # 16
    C2 = c2w.shape[0]          # 4
    C2p = 8                    # conv2 out-channels padded to one sublane tile
    C3 = t1w.shape[1]          # 16

    # conv1 weights, block-diagonal over the 4 pool-parity classes; bias folded
    # into the trailing "ones" column of the im2col.
    w1blk = np.zeros((4 * C1, 4 * 9 + 1), np.float32)
    for pc in range(4):
        w1blk[pc * C1:(pc + 1) * C1, pc * 9:pc * 9 + 9] = c1w.reshape(C1, 9)
        w1blk[pc * C1:(pc + 1) * C1, 4 * 9] = c1b

    # gather indices that build conv1's space-to-depth im2col from the zero-padded
    # input; the last flat element is an appended 1.0 (feeds the bias row).
    Hp, Wp = H + 2, W + 2
    one_idx = N * Hp * Wp
    idx = np.full((4 * 9 + 1, M1), one_idx, np.int32)
    for pc in range(4):
        ph, pw = pc // 2, pc % 2
        for t in range(9):
            kh, kw = t // 3, t % 3
            r = pc * 9 + t
            for n in range(N):
                for hh in range(H1):
                    for ww in range(W1):
                        col = (n * H1 + hh) * W1 + ww
                        idx[r, col] = (n * Hp + 2 * hh + ph + kh) * Wp + (2 * ww + pw + kw)

    # conv2 weights with the 9 taps concatenated along the contraction dim (K = 9*C1)
    w2cat = np.zeros((C2p, 9 * C1), np.float32)
    for t in range(9):
        kh, kw = t // 3, t % 3
        w2cat[:C2, t * C1:(t + 1) * C1] = c2w[:, :, kh, kw]

    # pool2 compaction: gathers the top-left element of every 2x2 window (only
    # remaining structure matrix, 8 KiB at this size)
    g2 = np.zeros((M1, M2), np.float32)
    for n in range(N):
        for hh in range(H2):
            for ww in range(W2):
                g2[(n * H1 + 2 * hh) * W1 + 2 * ww, (n * H2 + hh) * W2 + ww] = 1.0

    # t_conv1 weights stacked over its 4 (kh,kw) taps -> tap-blocked output layout
    wt1 = np.zeros((4 * C3, C2p), np.float32)
    for t in range(4):
        kh, kw = t // 2, t % 2
        wt1[t * C3:(t + 1) * C3, :C2] = t1w[:, :, kh, kw].T          # (Cout, Cin)

    # t_conv2 weights: block structure over (t_conv1 tap block) x (its own 4 taps)
    wt2 = np.zeros((16, 4 * C3), np.float32)
    for t1 in range(4):
        for t2 in range(4):
            kh, kw = t2 // 2, t2 % 2
            wt2[t1 * 4 + t2, t1 * C3:(t1 + 1) * C3] = t2w[:, 0, kh, kw]

    # packed biases: [conv2 (8) | t_conv1 tiled over taps (64) | t_conv2 tiled (16)]
    b2p = np.zeros((C2p,), np.float32)
    b2p[:C2] = c2b
    biases = np.concatenate([b2p, np.tile(t1b, 4),
                             np.full((16,), float(t2b[0]), np.float32)])

    return dict(
        idx=jnp.asarray(idx),                                  # (37, M1) int32 (XLA gather)
        w1blk=jnp.asarray(w1blk, bf16),                        # (64, 37)
        w2cat=jnp.asarray(w2cat, bf16),                        # (8, 144)
        g2=jnp.asarray(g2, bf16),                              # (M1, M2)
        wt1=jnp.asarray(wt1, bf16),                            # (64, 8)
        wt2=jnp.asarray(wt2, bf16),                            # (16, 64)
        biases=jnp.asarray(biases, f32).reshape(-1, 1),        # (88, 1)
    )


# ---------------------------------------------------------------------------
# The fused Pallas kernel (whole forward pass, single invocation)
# ---------------------------------------------------------------------------

def _make_kernel(H1, W1):
    log_w1 = W1.bit_length() - 1

    def kernel(p1_ref, w1_ref, w2_ref, g2_ref, wt1_ref, wt2_ref, b_ref, out_ref):
        f32, bf16 = jnp.float32, jnp.bfloat16

        def mm(a, v):
            return jnp.dot(a, v, preferred_element_type=f32)

        C1 = w1_ref.shape[0] // 4
        C2p = w2_ref.shape[0]
        C3 = wt1_ref.shape[0] // 4
        M1 = p1_ref.shape[1]

        def shift(x, delta):
            # y[:, m] = x[:, m + delta]; zero fill at the ends of the flat axis
            if delta == 0:
                return x
            rows, cols = x.shape
            pad = jnp.zeros((rows, abs(delta)), x.dtype)
            if delta > 0:
                return jnp.concatenate([x[:, delta:], pad], axis=1)
            return jnp.concatenate([pad, x[:, :cols + delta]], axis=1)

        # ---- conv1 + ReLU (bias via the im2col ones-row), then 2x2 maxpool as a
        #      plain max over the 4 parity blocks of the space-to-depth layout ----
        h1 = jnp.maximum(mm(w1_ref[...], p1_ref[...]), 0.0)            # (4*C1, M1)
        pool1 = jnp.maximum(jnp.maximum(h1[0:C1], h1[C1:2 * C1]),
                            jnp.maximum(h1[2 * C1:3 * C1], h1[3 * C1:4 * C1]))
        pool1 = pool1.astype(bf16)                                     # (C1, M1)

        # per-image (h, w) coordinates of every lane (for conv2's boundary masks)
        lane = lax.broadcasted_iota(jnp.int32, (C1, M1), 1)
        wq = lane & (W1 - 1)
        hq = (lane >> log_w1) & (H1 - 1)

        # ---- conv2: in-kernel im2col (lane shifts + masks) and ONE K=9*C1 dot ----
        pieces = []
        for t in range(9):
            dh, dw = t // 3 - 1, t % 3 - 1
            s = shift(pool1, dh * W1 + dw)
            ok = None
            if dh == 1:
                ok = hq < (H1 - 1)
            elif dh == -1:
                ok = hq >= 1
            if dw == 1:
                okw = wq < (W1 - 1)
                ok = okw if ok is None else ok & okw
            elif dw == -1:
                okw = wq >= 1
                ok = okw if ok is None else ok & okw
            if ok is not None:
                s = jnp.where(ok, s, jnp.zeros_like(s))
            pieces.append(s)
        im2col = jnp.concatenate(pieces, axis=0)                       # (9*C1, M1) bf16

        b = b_ref[...]                                                 # (88, 1) f32
        h2 = jnp.maximum(mm(w2_ref[...], im2col) + b[0:C2p], 0.0)      # (C2p, M1)

        # ---- 2x2 maxpool: shifted maxes (VPU) + one tiny compaction matmul ----
        mx = jnp.maximum(jnp.maximum(h2, shift(h2, 1)),
                         jnp.maximum(shift(h2, W1), shift(h2, W1 + 1)))
        pool2 = mm(mx.astype(bf16), g2_ref[...])                       # (C2p, M2)

        # ---- t_conv1 (2x2, stride 2): one stacked-tap matmul, tap-blocked output ----
        h3 = jnp.maximum(mm(wt1_ref[...], pool2.astype(bf16))
                         + b[C2p:C2p + 4 * C3], 0.0)                   # (4*C3, M2)

        # ---- t_conv2 (2x2, stride 2) + sigmoid; output is (tap1 x tap2)-blocked,
        #      un-interleaved by a free host-side reshape/transpose ----
        z = mm(wt2_ref[...], h3.astype(bf16)) + b[C2p + 4 * C3:C2p + 4 * C3 + 16]
        out_ref[...] = pl.reciprocal(1.0 + jnp.exp(-z), approx=True).astype(out_ref.dtype)

    return kernel


# ---------------------------------------------------------------------------
# Forward pass: one pallas_call, minimal XLA glue at the HBM boundaries
# ---------------------------------------------------------------------------

def conv_autoencoder_forward(x_nchw, prep):
    N, Cin, H, W = x_nchw.shape
    assert Cin == 1 and H % 4 == 0 and W % 4 == 0
    H1, W1, H2, W2 = H // 2, W // 2, H // 4, W // 4
    assert H1 & (H1 - 1) == 0 and W1 & (W1 - 1) == 0, "H/2 and W/2 must be powers of two"
    M1, M2 = N * H1 * W1, N * H2 * W2

    # conv1's space-to-depth im2col: one XLA pad + gather on the raw 2 KiB input
    # (a trailing 1.0 is appended so the same gather also emits the bias ones-row).
    xpad = jnp.pad(x_nchw[:, 0], ((0, 0), (1, 1), (1, 1)))
    xflat = jnp.concatenate([xpad.reshape(-1), jnp.ones((1,), x_nchw.dtype)])
    p1 = xflat[prep['idx']].astype(jnp.bfloat16)                       # (37, M1)

    args = (p1, prep['w1blk'], prep['w2cat'], prep['g2'],
            prep['wt1'], prep['wt2'], prep['biases'])

    flops = (2 * prep['w1blk'].shape[0] * prep['w1blk'].shape[1] * M1
             + 2 * prep['w2cat'].shape[0] * prep['w2cat'].shape[1] * M1
             + 2 * prep['w2cat'].shape[0] * M1 * M2
             + 2 * prep['wt1'].shape[0] * prep['wt1'].shape[1] * M2
             + 2 * prep['wt2'].shape[0] * prep['wt2'].shape[1] * M2)
    bytes_accessed = (sum(int(np.prod(a.shape)) * a.dtype.itemsize for a in args)
                      + 16 * M2 * 4)

    vmem = pl.BlockSpec(memory_space=pltpu.MemorySpace.VMEM)           # whole array in VMEM
    out_blk = pl.pallas_call(
        _make_kernel(H1, W1),
        out_shape=jax.ShapeDtypeStruct((16, M2), jnp.float32),
        in_specs=[vmem] * len(args),
        out_specs=vmem,
        cost_estimate=pl.CostEstimate(flops=flops, transcendentals=2 * 16 * M2,
                                      bytes_accessed=bytes_accessed),
    )(*args)

    # un-interleave the tap-blocked result: rows = (kh1, kw1, kh, kw), cols = (n, h2, w2)
    out = out_blk.reshape(2, 2, 2, 2, N, H2, W2)
    out = out.transpose(4, 5, 0, 2, 6, 1, 3).reshape(N, 1, H, W)
    return out


# ---------------------------------------------------------------------------
# Pure-JAX reference (independent path, for verification)
# ---------------------------------------------------------------------------

def reference_forward(x, p):
    def conv(x, w, b):
        y = lax.conv_general_dilated(x, w, (1, 1), ((1, 1), (1, 1)),
                                     dimension_numbers=('NCHW', 'OIHW', 'NCHW'))
        return jnp.maximum(y + b.reshape(1, -1, 1, 1), 0.0)

    def pool(x):
        return lax.reduce_window(x, -jnp.inf, lax.max,
                                 (1, 1, 2, 2), (1, 1, 2, 2), 'VALID')

    def tconv(x, w, b):
        w2 = jnp.flip(jnp.transpose(w, (1, 0, 2, 3)), axis=(2, 3))
        y = lax.conv_general_dilated(x, w2, (1, 1), ((1, 1), (1, 1)),
                                     lhs_dilation=(2, 2),
                                     dimension_numbers=('NCHW', 'OIHW', 'NCHW'))
        return y + b.reshape(1, -1, 1, 1)

    x = pool(conv(x, p['conv1_w'], p['conv1_b']))
    x = pool(conv(x, p['conv2_w'], p['conv2_b']))
    x = jnp.maximum(tconv(x, p['tconv1_w'], p['tconv1_b']), 0.0)
    x = jax.nn.sigmoid(tconv(x, p['tconv2_w'], p['tconv2_b']))
    return x


# ---------------------------------------------------------------------------

if __name__ == "__main__":
    key = jax.random.PRNGKey(0)
    ks = jax.random.split(key, 9)

    def u(k, shape, fan_in):
        bound = 1.0 / np.sqrt(fan_in)
        return jax.random.uniform(k, shape, jnp.float32, -bound, bound)

    params = {
        'conv1_w': u(ks[0], (16, 1, 3, 3), 9),     # Conv2d(1, 16, 3, padding=1)
        'conv1_b': u(ks[1], (16,), 9),
        'conv2_w': u(ks[2], (4, 16, 3, 3), 144),   # Conv2d(16, 4, 3, padding=1)
        'conv2_b': u(ks[3], (4,), 144),
        'tconv1_w': u(ks[4], (4, 16, 2, 2), 16),   # ConvTranspose2d(4, 16, 2, stride=2)
        'tconv1_b': u(ks[5], (16,), 16),
        'tconv2_w': u(ks[6], (16, 1, 2, 2), 64),   # ConvTranspose2d(16, 1, 2, stride=2)
        'tconv2_b': u(ks[7], (1,), 64),
    }
    x = jax.random.normal(ks[8], (2, 1, 16, 16), jnp.float32)

    N, _, H, W = x.shape
    prep = prepare_params(params, N, H, W)         # one-time weight/constant prep

    fwd = jax.jit(conv_autoencoder_forward)
    out = jax.block_until_ready(fwd(x, prep))
    ref = jax.block_until_ready(reference_forward(x, params))

    assert out.shape == (2, 1, 16, 16), out.shape
    np.testing.assert_allclose(np.asarray(out), np.asarray(ref), rtol=2e-2, atol=2e-2)
    print("KERNEL_OK")
</pallas_src>

<mosaic_0001>
module attributes {stable_mosaic.version = 11 : i64} {
  func.func @kernel(%arg0: memref<37x128xbf16, #tpu.memory_space<vmem>>, %arg1: memref<64x37xbf16, #tpu.memory_space<vmem>>, %arg2: memref<8x144xbf16, #tpu.memory_space<vmem>>, %arg3: memref<128x32xbf16, #tpu.memory_space<vmem>>, %arg4: memref<64x8xbf16, #tpu.memory_space<vmem>>, %arg5: memref<16x64xbf16, #tpu.memory_space<vmem>>, %arg6: memref<88x1xf32, #tpu.memory_space<vmem>>, %arg7: memref<16x32xf32, #tpu.memory_space<vmem>>) attributes {dimension_semantics = [], scalar_prefetch = 0 : i64, scratch_operands = 0 : i64, tpu.core_type = #tpu.core_type<tc>} {
    %c0 = arith.constant 0 : index
    %c0_0 = arith.constant 0 : index
    %0 = vector.load %arg1[%c0, %c0_0] : memref<64x37xbf16, #tpu.memory_space<vmem>>, vector<64x37xbf16>
    %c0_1 = arith.constant 0 : index
    %c0_2 = arith.constant 0 : index
    %1 = vector.load %arg0[%c0_1, %c0_2] : memref<37x128xbf16, #tpu.memory_space<vmem>>, vector<37x128xbf16>
    %cst = arith.constant dense<0.000000e+00> : vector<64x128xf32>
    %2 = tpu.matmul %0, %1, %cst {dimension_numbers = #tpu.dot_dimension_numbers<[1], [0], [0], [1], [0, 0, 1, 1], [], []>} : vector<64x37xbf16>, vector<37x128xbf16>, vector<64x128xf32> -> vector<64x128xf32>
    %cst_3 = arith.constant 0.000000e+00 : f32
    %3 = vector.broadcast %cst_3 : f32 to vector<64x128xf32>
    %4 = arith.maximumf %2, %3 : vector<64x128xf32>
    %5 = vector.extract_strided_slice %4 {offsets = [0, 0], sizes = [16, 128], strides = [1, 1]} : vector<64x128xf32> to vector<16x128xf32>
    %6 = vector.extract_strided_slice %4 {offsets = [16, 0], sizes = [16, 128], strides = [1, 1]} : vector<64x128xf32> to vector<16x128xf32>
    %7 = arith.maximumf %5, %6 : vector<16x128xf32>
    %8 = vector.extract_strided_slice %4 {offsets = [32, 0], sizes = [16, 128], strides = [1, 1]} : vector<64x128xf32> to vector<16x128xf32>
    %9 = vector.extract_strided_slice %4 {offsets = [48, 0], sizes = [16, 128], strides = [1, 1]} : vector<64x128xf32> to vector<16x128xf32>
    %10 = arith.maximumf %8, %9 : vector<16x128xf32>
    %11 = arith.maximumf %7, %10 : vector<16x128xf32>
    %12 = arith.truncf %11 : vector<16x128xf32> to vector<16x128xbf16>
    %13 = tpu.iota {dimensions = array<i32: 1>} : vector<16x128xi32>
    %c7_i32 = arith.constant 7 : i32
    %14 = vector.broadcast %c7_i32 : i32 to vector<16x128xi32>
    %15 = arith.andi %13, %14 : vector<16x128xi32>
    %c3_i32 = arith.constant 3 : i32
    %16 = vector.broadcast %c3_i32 : i32 to vector<16x128xi32>
    %17 = arith.shrsi %13, %16 : vector<16x128xi32>
    %c7_i32_4 = arith.constant 7 : i32
    %18 = vector.broadcast %c7_i32_4 : i32 to vector<16x128xi32>
    %19 = arith.andi %17, %18 : vector<16x128xi32>
    %cst_5 = arith.constant 0.000000e+00 : bf16
    %20 = vector.broadcast %cst_5 : bf16 to vector<16x9xbf16>
    %21 = vector.extract_strided_slice %12 {offsets = [0, 0], sizes = [16, 119], strides = [1, 1]} : vector<16x128xbf16> to vector<16x119xbf16>
    %22 = tpu.concatenate %20, %21 in 1 : vector<16x9xbf16>, vector<16x119xbf16> -> vector<16x128xbf16>
    %c1_i32 = arith.constant 1 : i32
    %23 = vector.broadcast %c1_i32 : i32 to vector<16x128xi32>
    %24 = arith.cmpi sge, %19, %23 : vector<16x128xi32>
    %c1_i32_6 = arith.constant 1 : i32
    %25 = vector.broadcast %c1_i32_6 : i32 to vector<16x128xi32>
    %26 = arith.cmpi sge, %15, %25 : vector<16x128xi32>
    %27 = arith.andi %24, %26 : vector<16x128xi1>
    %cst_7 = arith.constant 0.000000e+00 : bf16
    %28 = vector.broadcast %cst_7 : bf16 to vector<16x128xbf16>
    %29 = arith.select %27, %22, %28 : vector<16x128xi1>, vector<16x128xbf16>
    %cst_8 = arith.constant 0.000000e+00 : bf16
    %30 = vector.broadcast %cst_8 : bf16 to vector<16x8xbf16>
    %31 = vector.extract_strided_slice %12 {offsets = [0, 0], sizes = [16, 120], strides = [1, 1]} : vector<16x128xbf16> to vector<16x120xbf16>
    %32 = tpu.concatenate %30, %31 in 1 : vector<16x8xbf16>, vector<16x120xbf16> -> vector<16x128xbf16>
    %c1_i32_9 = arith.constant 1 : i32
    %33 = vector.broadcast %c1_i32_9 : i32 to vector<16x128xi32>
    %34 = arith.cmpi sge, %19, %33 : vector<16x128xi32>
    %cst_10 = arith.constant 0.000000e+00 : bf16
    %35 = vector.broadcast %cst_10 : bf16 to vector<16x128xbf16>
    %36 = arith.select %34, %32, %35 : vector<16x128xi1>, vector<16x128xbf16>
    %cst_11 = arith.constant 0.000000e+00 : bf16
    %37 = vector.broadcast %cst_11 : bf16 to vector<16x7xbf16>
    %38 = vector.extract_strided_slice %12 {offsets = [0, 0], sizes = [16, 121], strides = [1, 1]} : vector<16x128xbf16> to vector<16x121xbf16>
    %39 = tpu.concatenate %37, %38 in 1 : vector<16x7xbf16>, vector<16x121xbf16> -> vector<16x128xbf16>
    %c1_i32_12 = arith.constant 1 : i32
    %40 = vector.broadcast %c1_i32_12 : i32 to vector<16x128xi32>
    %41 = arith.cmpi sge, %19, %40 : vector<16x128xi32>
    %c7_i32_13 = arith.constant 7 : i32
    %42 = vector.broadcast %c7_i32_13 : i32 to vector<16x128xi32>
    %43 = arith.cmpi slt, %15, %42 : vector<16x128xi32>
    %44 = arith.andi %41, %43 : vector<16x128xi1>
    %cst_14 = arith.constant 0.000000e+00 : bf16
    %45 = vector.broadcast %cst_14 : bf16 to vector<16x128xbf16>
    %46 = arith.select %44, %39, %45 : vector<16x128xi1>, vector<16x128xbf16>
    %cst_15 = arith.constant 0.000000e+00 : bf16
    %47 = vector.broadcast %cst_15 : bf16 to vector<16x1xbf16>
    %48 = vector.extract_strided_slice %12 {offsets = [0, 0], sizes = [16, 127], strides = [1, 1]} : vector<16x128xbf16> to vector<16x127xbf16>
    %49 = tpu.concatenate %47, %48 in 1 : vector<16x1xbf16>, vector<16x127xbf16> -> vector<16x128xbf16>
    %c1_i32_16 = arith.constant 1 : i32
    %50 = vector.broadcast %c1_i32_16 : i32 to vector<16x128xi32>
    %51 = arith.cmpi sge, %15, %50 : vector<16x128xi32>
    %cst_17 = arith.constant 0.000000e+00 : bf16
    %52 = vector.broadcast %cst_17 : bf16 to vector<16x128xbf16>
    %53 = arith.select %51, %49, %52 : vector<16x128xi1>, vector<16x128xbf16>
    %cst_18 = arith.constant 0.000000e+00 : bf16
    %54 = vector.broadcast %cst_18 : bf16 to vector<16x1xbf16>
    %55 = vector.extract_strided_slice %12 {offsets = [0, 1], sizes = [16, 127], strides = [1, 1]} : vector<16x128xbf16> to vector<16x127xbf16>
    %56 = tpu.concatenate %55, %54 in 1 : vector<16x127xbf16>, vector<16x1xbf16> -> vector<16x128xbf16>
    %c7_i32_19 = arith.constant 7 : i32
    %57 = vector.broadcast %c7_i32_19 : i32 to vector<16x128xi32>
    %58 = arith.cmpi slt, %15, %57 : vector<16x128xi32>
    %cst_20 = arith.constant 0.000000e+00 : bf16
    %59 = vector.broadcast %cst_20 : bf16 to vector<16x128xbf16>
    %60 = arith.select %58, %56, %59 : vector<16x128xi1>, vector<16x128xbf16>
    %cst_21 = arith.constant 0.000000e+00 : bf16
    %61 = vector.broadcast %cst_21 : bf16 to vector<16x7xbf16>
    %62 = vector.extract_strided_slice %12 {offsets = [0, 7], sizes = [16, 121], strides = [1, 1]} : vector<16x128xbf16> to vector<16x121xbf16>
    %63 = tpu.concatenate %62, %61 in 1 : vector<16x121xbf16>, vector<16x7xbf16> -> vector<16x128xbf16>
    %c7_i32_22 = arith.constant 7 : i32
    %64 = vector.broadcast %c7_i32_22 : i32 to vector<16x128xi32>
    %65 = arith.cmpi slt, %19, %64 : vector<16x128xi32>
    %c1_i32_23 = arith.constant 1 : i32
    %66 = vector.broadcast %c1_i32_23 : i32 to vector<16x128xi32>
    %67 = arith.cmpi sge, %15, %66 : vector<16x128xi32>
    %68 = arith.andi %65, %67 : vector<16x128xi1>
    %cst_24 = arith.constant 0.000000e+00 : bf16
    %69 = vector.broadcast %cst_24 : bf16 to vector<16x128xbf16>
    %70 = arith.select %68, %63, %69 : vector<16x128xi1>, vector<16x128xbf16>
    %cst_25 = arith.constant 0.000000e+00 : bf16
    %71 = vector.broadcast %cst_25 : bf16 to vector<16x8xbf16>
    %72 = vector.extract_strided_slice %12 {offsets = [0, 8], sizes = [16, 120], strides = [1, 1]} : vector<16x128xbf16> to vector<16x120xbf16>
    %73 = tpu.concatenate %72, %71 in 1 : vector<16x120xbf16>, vector<16x8xbf16> -> vector<16x128xbf16>
    %c7_i32_26 = arith.constant 7 : i32
    %74 = vector.broadcast %c7_i32_26 : i32 to vector<16x128xi32>
    %75 = arith.cmpi slt, %19, %74 : vector<16x128xi32>
    %cst_27 = arith.constant 0.000000e+00 : bf16
    %76 = vector.broadcast %cst_27 : bf16 to vector<16x128xbf16>
    %77 = arith.select %75, %73, %76 : vector<16x128xi1>, vector<16x128xbf16>
    %cst_28 = arith.constant 0.000000e+00 : bf16
    %78 = vector.broadcast %cst_28 : bf16 to vector<16x9xbf16>
    %79 = vector.extract_strided_slice %12 {offsets = [0, 9], sizes = [16, 119], strides = [1, 1]} : vector<16x128xbf16> to vector<16x119xbf16>
    %80 = tpu.concatenate %79, %78 in 1 : vector<16x119xbf16>, vector<16x9xbf16> -> vector<16x128xbf16>
    %c7_i32_29 = arith.constant 7 : i32
    %81 = vector.broadcast %c7_i32_29 : i32 to vector<16x128xi32>
    %82 = arith.cmpi slt, %19, %81 : vector<16x128xi32>
    %c7_i32_30 = arith.constant 7 : i32
    %83 = vector.broadcast %c7_i32_30 : i32 to vector<16x128xi32>
    %84 = arith.cmpi slt, %15, %83 : vector<16x128xi32>
    %85 = arith.andi %82, %84 : vector<16x128xi1>
    %cst_31 = arith.constant 0.000000e+00 : bf16
    %86 = vector.broadcast %cst_31 : bf16 to vector<16x128xbf16>
    %87 = arith.select %85, %80, %86 : vector<16x128xi1>, vector<16x128xbf16>
    %88 = tpu.concatenate %29, %36, %46, %53, %12, %60, %70, %77, %87 in 0 : vector<16x128xbf16>, vector<16x128xbf16>, vector<16x128xbf16>, vector<16x128xbf16>, vector<16x128xbf16>, vector<16x128xbf16>, vector<16x128xbf16>, vector<16x128xbf16>, vector<16x128xbf16> -> vector<144x128xbf16>
    %c0_32 = arith.constant 0 : index
    %c0_33 = arith.constant 0 : index
    %89 = vector.load %arg6[%c0_32, %c0_33] : memref<88x1xf32, #tpu.memory_space<vmem>>, vector<88x1xf32>
    %c0_34 = arith.constant 0 : index
    %c0_35 = arith.constant 0 : index
    %90 = vector.load %arg2[%c0_34, %c0_35] : memref<8x144xbf16, #tpu.memory_space<vmem>>, vector<8x144xbf16>
    %cst_36 = arith.constant dense<0.000000e+00> : vector<8x128xf32>
    %91 = tpu.matmul %90, %88, %cst_36 {dimension_numbers = #tpu.dot_dimension_numbers<[1], [0], [0], [1], [0, 0, 1, 1], [], []>} : vector<8x144xbf16>, vector<144x128xbf16>, vector<8x128xf32> -> vector<8x128xf32>
    %92 = vector.extract_strided_slice %89 {offsets = [0, 0], sizes = [8, 1], strides = [1, 1]} : vector<88x1xf32> to vector<8x1xf32>
    %93 = vector.broadcast %92 : vector<8x1xf32> to vector<8x128xf32>
    %94 = arith.addf %91, %93 : vector<8x128xf32>
    %cst_37 = arith.constant 0.000000e+00 : f32
    %95 = vector.broadcast %cst_37 : f32 to vector<8x128xf32>
    %96 = arith.maximumf %94, %95 : vector<8x128xf32>
    %cst_38 = arith.constant 0.000000e+00 : f32
    %97 = vector.broadcast %cst_38 : f32 to vector<8x1xf32>
    %98 = vector.extract_strided_slice %96 {offsets = [0, 1], sizes = [8, 127], strides = [1, 1]} : vector<8x128xf32> to vector<8x127xf32>
    %99 = tpu.concatenate %98, %97 in 1 : vector<8x127xf32>, vector<8x1xf32> -> vector<8x128xf32>
    %100 = arith.maximumf %96, %99 : vector<8x128xf32>
    %cst_39 = arith.constant 0.000000e+00 : f32
    %101 = vector.broadcast %cst_39 : f32 to vector<8x8xf32>
    %102 = vector.extract_strided_slice %96 {offsets = [0, 8], sizes = [8, 120], strides = [1, 1]} : vector<8x128xf32> to vector<8x120xf32>
    %103 = tpu.concatenate %102, %101 in 1 : vector<8x120xf32>, vector<8x8xf32> -> vector<8x128xf32>
    %cst_40 = arith.constant 0.000000e+00 : f32
    %104 = vector.broadcast %cst_40 : f32 to vector<8x9xf32>
    %105 = vector.extract_strided_slice %96 {offsets = [0, 9], sizes = [8, 119], strides = [1, 1]} : vector<8x128xf32> to vector<8x119xf32>
    %106 = tpu.concatenate %105, %104 in 1 : vector<8x119xf32>, vector<8x9xf32> -> vector<8x128xf32>
    %107 = arith.maximumf %103, %106 : vector<8x128xf32>
    %108 = arith.maximumf %100, %107 : vector<8x128xf32>
    %109 = arith.truncf %108 : vector<8x128xf32> to vector<8x128xbf16>
    %c0_41 = arith.constant 0 : index
    %c0_42 = arith.constant 0 : index
    %110 = vector.load %arg3[%c0_41, %c0_42] : memref<128x32xbf16, #tpu.memory_space<vmem>>, vector<128x32xbf16>
    %cst_43 = arith.constant dense<0.000000e+00> : vector<8x32xf32>
    %111 = tpu.matmul %109, %110, %cst_43 {dimension_numbers = #tpu.dot_dimension_numbers<[1], [0], [0], [1], [0, 0, 1, 1], [], []>} : vector<8x128xbf16>, vector<128x32xbf16>, vector<8x32xf32> -> vector<8x32xf32>
    %c0_44 = arith.constant 0 : index
    %c0_45 = arith.constant 0 : index
    %112 = vector.load %arg4[%c0_44, %c0_45] : memref<64x8xbf16, #tpu.memory_space<vmem>>, vector<64x8xbf16>
    %113 = arith.truncf %111 : vector<8x32xf32> to vector<8x32xbf16>
    %cst_46 = arith.constant dense<0.000000e+00> : vector<64x32xf32>
    %114 = tpu.matmul %112, %113, %cst_46 {dimension_numbers = #tpu.dot_dimension_numbers<[1], [0], [0], [1], [0, 0, 1, 1], [], []>} : vector<64x8xbf16>, vector<8x32xbf16>, vector<64x32xf32> -> vector<64x32xf32>
    %115 = vector.extract_strided_slice %89 {offsets = [8, 0], sizes = [64, 1], strides = [1, 1]} : vector<88x1xf32> to vector<64x1xf32>
    %116 = vector.broadcast %115 : vector<64x1xf32> to vector<64x32xf32>
    %117 = arith.addf %114, %116 : vector<64x32xf32>
    %cst_47 = arith.constant 0.000000e+00 : f32
    %118 = vector.broadcast %cst_47 : f32 to vector<64x32xf32>
    %119 = arith.maximumf %117, %118 : vector<64x32xf32>
    %c0_48 = arith.constant 0 : index
    %c0_49 = arith.constant 0 : index
    %120 = vector.load %arg5[%c0_48, %c0_49] : memref<16x64xbf16, #tpu.memory_space<vmem>>, vector<16x64xbf16>
    %121 = arith.truncf %119 : vector<64x32xf32> to vector<64x32xbf16>
    %cst_50 = arith.constant dense<0.000000e+00> : vector<16x32xf32>
    %122 = tpu.matmul %120, %121, %cst_50 {dimension_numbers = #tpu.dot_dimension_numbers<[1], [0], [0], [1], [0, 0, 1, 1], [], []>} : vector<16x64xbf16>, vector<64x32xbf16>, vector<16x32xf32> -> vector<16x32xf32>
    %123 = vector.extract_strided_slice %89 {offsets = [72, 0], sizes = [16, 1], strides = [1, 1]} : vector<88x1xf32> to vector<16x1xf32>
    %124 = vector.broadcast %123 : vector<16x1xf32> to vector<16x32xf32>
    %125 = arith.addf %122, %124 : vector<16x32xf32>
    %cst_51 = arith.constant 0.000000e+00 : f32
    %126 = vector.broadcast %cst_51 : f32 to vector<16x32xf32>
    %127 = arith.subf %126, %125 : vector<16x32xf32>
    %128 = math.exp %127 : vector<16x32xf32>
    %cst_52 = arith.constant 1.000000e+00 : f32
    %129 = vector.broadcast %cst_52 : f32 to vector<16x32xf32>
    %130 = arith.addf %129, %128 : vector<16x32xf32>
    %131 = tpu.reciprocal %130 {approx = true} : vector<16x32xf32> -> vector<16x32xf32>
    %c0_53 = arith.constant 0 : index
    %c0_54 = arith.constant 0 : index
    %132 = vector.load %arg7[%c0_53, %c0_54] : memref<16x32xf32, #tpu.memory_space<vmem>>, vector<16x32xf32>
    tpu.vector_store %arg7[%c0_53, %c0_54], %131 {strides = array<i32>} : memref<16x32xf32, #tpu.memory_space<vmem>>, vector<16x32xf32>,
    return
  }
}

</mosaic_0001>

<llo_original>
// kernel: conv_autoencoder_forward.1
$region0: #{conv_autoencoder_forward.1}
  #allocation0 [shape = 'u32[]', space=smem, size = 0x4, offset = 0x4, fixed_abs, tag = 'smem constant byte address 0x4 - core index']
  #allocation1 [shape = 'u32[144,128]{1,0:T(1,128)}', space=vmem, size = 0x12000, scoped, tag = 'internal scratch']
  %s0 = inlined_call_operand.vmem [shape: bf16[37,128], index: 0, kind: input, shape index: {}]
  %s1 = inlined_call_operand.vmem [shape: bf16[64,37], index: 1, kind: input, shape index: {}]
  %s2 = inlined_call_operand.vmem [shape: bf16[8,144], index: 2, kind: input, shape index: {}]
  %s3 = inlined_call_operand.vmem [shape: bf16[128,32], index: 3, kind: input, shape index: {}]
  %s4 = inlined_call_operand.vmem [shape: bf16[64,8], index: 4, kind: input, shape index: {}]
  %s5 = inlined_call_operand.vmem [shape: bf16[16,64], index: 5, kind: input, shape index: {}]
  %s6 = inlined_call_operand.vmem [shape: f32[88,1], index: 6, kind: input, shape index: {}]
  %s7 = inlined_call_operand.vmem [shape: f32[16,32], index: 7, kind: output, shape index: {}]
  %s8 = sld [smem:[#allocation0]]
  $region38: #{conv_autoencoder_forward.1} parent=0
    _
  %s10 = ssub.s32 1, %s8
  %s11 = scalar_select 0, %s10, %s8
  // Predicated region
  $region2: #{conv_autoencoder_forward.1} parent=0 // pred_check
    _
  $region3: #{conv_autoencoder_forward.1} parent=0 // pred_check_branch
    %13 = sbr.rel (0) target = $region5
  $region4: #{conv_autoencoder_forward.1} parent=0 // pred_region
    _
  $region5: #{conv_autoencoder_forward.1} parent=0 // pred_fallthru
    _
  // Predicated region
  $region6: #{conv_autoencoder_forward.1} parent=0 // pred_check
    _
  $region7: #{conv_autoencoder_forward.1} parent=0 // pred_check_branch
    %15 = sbr.rel (0) target = $region9
  $region8: #{conv_autoencoder_forward.1} parent=0 // pred_region
    _
  $region9: #{conv_autoencoder_forward.1} parent=0 // pred_fallthru
    _
  // Predicated region
  $region10: #{conv_autoencoder_forward.1} parent=0 // pred_check
    _
  $region11: #{conv_autoencoder_forward.1} parent=0 // pred_check_branch
    %17 = sbr.rel (0) target = $region13
  $region12: #{conv_autoencoder_forward.1} parent=0 // pred_region
    _
  $region13: #{conv_autoencoder_forward.1} parent=0 // pred_fallthru
    _
  // Predicated region
  $region14: #{conv_autoencoder_forward.1} parent=0 // pred_check
    _
  $region15: #{conv_autoencoder_forward.1} parent=0 // pred_check_branch
    %19 = sbr.rel (0) target = $region17
  $region16: #{conv_autoencoder_forward.1} parent=0 // pred_region
    _
  $region17: #{conv_autoencoder_forward.1} parent=0 // pred_fallthru
    _
  // Predicated region
  $region18: #{conv_autoencoder_forward.1} parent=0 // pred_check
    _
  $region19: #{conv_autoencoder_forward.1} parent=0 // pred_check_branch
    %21 = sbr.rel (0) target = $region21
  $region20: #{conv_autoencoder_forward.1} parent=0 // pred_region
    _
  $region21: #{conv_autoencoder_forward.1} parent=0 // pred_fallthru
    _
  // Predicated region
  $region22: #{conv_autoencoder_forward.1} parent=0 // pred_check
    _
  $region23: #{conv_autoencoder_forward.1} parent=0 // pred_check_branch
    %23 = sbr.rel (0) target = $region25
  $region24: #{conv_autoencoder_forward.1} parent=0 // pred_region
    _
  $region25: #{conv_autoencoder_forward.1} parent=0 // pred_fallthru
    _
  // Predicated region
  $region26: #{conv_autoencoder_forward.1} parent=0 // pred_check
    _
  $region27: #{conv_autoencoder_forward.1} parent=0 // pred_check_branch
    %25 = sbr.rel (0) target = $region29
  $region28: #{conv_autoencoder_forward.1} parent=0 // pred_region
    _
  $region29: #{conv_autoencoder_forward.1} parent=0 // pred_fallthru
    _
  %v29 = vld [vmem:[%s1] sm:$0xf]
  %v30 = vld [vmem:[%s1 + $0x4] sm:$0xf]
  %v31 = vld [vmem:[%s1 + $0x8] sm:$0xf]
  %v32 = vld [vmem:[%s1 + $0xc] sm:$0xf]
  %v33 = vld [vmem:[%s1 + $0x10] sm:$0xf]
  %v34 = vld [vmem:[%s1 + $0x14] sm:$0xf]
  %v35 = vld [vmem:[%s1 + $0x18] sm:$0xf]
  %v36 = vld [vmem:[%s1 + $0x1c] sm:$0xf]
  %v37 = vld [vmem:[%s0] sm:$0xf]
  %v38 = vld [vmem:[%s0 + $0x4] sm:$0xf]
  %v39 = vld [vmem:[%s0 + $0x8] sm:$0xf]
  %v40 = vld [vmem:[%s0 + $0xc] sm:$0xf]
  %v41 = vld [vmem:[%s0 + $0x10] sm:$0x7]
  %v50 = vunpack.c.l.b16 %v29
  %v51 = vunpack.c.l.b16 %v30
  %v52 = vunpack.c.l.b16 %v31
  %v53 = vunpack.c.l.b16 %v32
  %v54 = vunpack.c.l.b16 %v33
  %v55 = vunpack.c.l.b16 %v34
  %v56 = vunpack.c.l.b16 %v35
  %v57 = vunpack.c.l.b16 %v36
  %v58 = vpack.c.b16 %v51, %v50
  %v59 = vpack.c.b16 %v53, %v52
  %v60 = vpack.c.b16 %v55, %v54
  %v61 = vpack.c.b16 %v57, %v56
  %v67 = vunpack.c.l.b16 %v37
  %v68 = vunpack.c.l.b16 %v38
  %v69 = vunpack.c.l.b16 %v39
  %v70 = vunpack.c.l.b16 %v40
  %v71 = vunpack.c.l.b16 %v41
  %v72 = vpack.c.b16 %v68, %v67
  %v73 = vpack.c.b16 %v70, %v69
  %v74 = vpack.c.b16 %v71, %v71
  %vm77 = vcmask 302080
  %v79 = vsel %vm77, %v58, 0
  %v82 = vsel %vm77, %v59, 0
  %v85 = vsel %vm77, %v60, 0
  %v88 = vsel %vm77, %v61, 0
  %vm90 = vcmask 1041408
  %vm91 = vcmask 1042432
  %v92 = vsel %vm90, 4294967295, 65535
  %v93 = vsel %vm91, %v92, 0
  %v95 = vand.u32 %v74, %v93
  %97 = vmatprep.subr.bf16.mxu0 0
  %98 = vmatpush1.bf16.msra.mxu0 %v72
  %99 = vmatprep.subr.bf16.mxu0 0
  %100 = vmatpush1.bf16.msra.mxu0 %v73
  %101 = vmatprep.subr.bf16.mxu0 0
  %102 = vmatpush1.bf16.msra.mxu0 %v95
  %103 = vmatprep.subr.bf16.mxu0 0
  %104 = vmatpush1.bf16.msra.mxu0 0
  %105 = vmatprep.subr.bf16.mxu0 0
  %106 = vmatpush1.bf16.msra.mxu0 0
  %107 = vmatprep.subr.bf16.mxu0 0
  %108 = vmatpush1.bf16.msra.mxu0 0
  %109 = vmatprep.subr.bf16.mxu0 0
  %110 = vmatpush1.bf16.msra.mxu0 0
  %111 = vmatprep.subr.bf16.mxu0 0
  %112 = vmatpush1.bf16.msra.mxu0 0
  %113 = vmatprep.subr.bf16.mxu0 0
  %114 = vmatpush1.bf16.msra.mxu0 0
  %115 = vmatprep.subr.bf16.mxu0 0
  %116 = vmatpush1.bf16.msra.mxu0 0
  %117 = vmatprep.subr.bf16.mxu0 0
  %118 = vmatpush1.bf16.msra.mxu0 0
  %119 = vmatprep.subr.bf16.mxu0 0
  %120 = vmatpush1.bf16.msra.mxu0 0
  %121 = vmatprep.subr.bf16.mxu0 0
  %122 = vmatpush1.bf16.msra.mxu0 0
  %123 = vmatprep.subr.bf16.mxu0 0
  %124 = vmatpush1.bf16.msra.mxu0 0
  %125 = vmatprep.subr.bf16.mxu0 0
  %126 = vmatpush1.bf16.msra.mxu0 0
  %127 = vmatprep.subr.bf16.mxu0 0
  %128 = vmatpush1.bf16.msra.mxu0 0
  %129 = vmatprep.mubr.bf16.mxu0 0
  %130 = vmatmul.mubr.bf16.gmra.mrb[0].mxu0 %v79
  %v131 = vpop.f32.mrb[0].mxu0
  %v132 = vadd.f32 0.0, %v131
  %v133 = vpop.f32.mrb[0].mxu0
  %v134 = vpop.f32.mrb[0].mxu0
  %v135 = vadd.f32 0.0, %v134
  %v136 = vpop.f32.mrb[0].mxu0
  %137 = vmatprep.mubr.bf16.mxu0 0
  %138 = vmatmul.mubr.bf16.gmra.mrb[0].mxu0 %v82
  %v139 = vpop.f32.mrb[0].mxu0
  %v140 = vadd.f32 0.0, %v139
  %v141 = vpop.f32.mrb[0].mxu0
  %v142 = vpop.f32.mrb[0].mxu0
  %v143 = vadd.f32 0.0, %v142
  %v144 = vpop.f32.mrb[0].mxu0
  %145 = vmatprep.mubr.bf16.mxu0 0
  %146 = vmatmul.mubr.bf16.gmra.mrb[0].mxu0 %v85
  %v147 = vpop.f32.mrb[0].mxu0
  %v148 = vadd.f32 0.0, %v147
  %v149 = vpop.f32.mrb[0].mxu0
  %v150 = vpop.f32.mrb[0].mxu0
  %v151 = vadd.f32 0.0, %v150
  %v152 = vpop.f32.mrb[0].mxu0
  %153 = vmatprep.mubr.bf16.mxu0 0
  %154 = vmatmul.mubr.bf16.gmra.mrb[0].mxu0 %v88
  %v155 = vpop.f32.mrb[0].mxu0
  %v156 = vadd.f32 0.0, %v155
  %v157 = vpop.f32.mrb[0].mxu0
  %v158 = vpop.f32.mrb[0].mxu0
  %v159 = vadd.f32 0.0, %v158
  %v160 = vpop.f32.mrb[0].mxu0
  %161 = vdwg.mxu0
  %v162 = vmax.f32 %v132, 0.0
  %v163 = vmax.f32 %v135, 0.0
  %v164 = vmax.f32 %v140, 0.0
  %v165 = vmax.f32 %v143, 0.0
  %v166 = vmax.f32 %v148, 0.0
  %v167 = vmax.f32 %v151, 0.0
  %v168 = vmax.f32 %v156, 0.0
  %v169 = vmax.f32 %v159, 0.0
  %v170 = vmax.f32 %v162, %v164
  %v171 = vmax.f32 %v163, %v165
  %v172 = vmax.f32 %v166, %v168
  %v173 = vmax.f32 %v167, %v169
  %v174 = vmax.f32 %v170, %v172
  %v175 = vmax.f32 %v171, %v173
  %v176 = vpack.c.bf16 %v175, %v174
  %v177 = vlaneseq
  %v178 = vand.u32 %v177, 127
  %v179 = vand.u32 %v178, 7
  %v180 = vshra.s32 %v178, 3
  %v181 = vand.u32 %v180, 7
  %183 = vrot.lane.b32.xlu0 %v176, 9
  %v184 = vpop.permute.xlu0 %183
  %vm185 = vcmask 72704
  %v188 = vsel %vm185, 0, %v184
  %vm190 = vcmp.ge.s32.totalorder %v181, 1
  %vm191 = vcmp.ge.s32.totalorder %v179, 1
  %vm192 = vmand %vm190, %vm191
  %vm193 = vmpackc.low %vm192, %vm192
  %v194 = vsel %vm193, 65537, 0
  %v195 = vlaneseq
  %v196 = vshrl.u32 %v195, 7
  %v197 = vsub.s32 0, %v196
  %v198 = vrot.slane %v194, %v197
  %vm199 = vcmp.ne.s16.totalorder %v198, 0
  %v200 = vsel %vm199, %v188, 0
  %201 = vrot.lane.b32.xlu0 %v176, 8
  %v202 = vpop.permute.xlu0 %201
  %vm203 = vcmask 64512
  %v205 = vsel %vm203, 0, %v202
  %vm207 = vmpackc.low %vm190, %vm190
  %v208 = vsel %vm207, 65537, 0
  %v209 = vlaneseq
  %v210 = vshrl.u32 %v209, 7
  %v211 = vsub.s32 0, %v210
  %v212 = vrot.slane %v208, %v211
  %vm213 = vcmp.ne.s16.totalorder %v212, 0
  %v214 = vsel %vm213, %v205, 0
  %215 = vrot.lane.b32.xlu0 %v176, 7
  %v216 = vpop.permute.xlu0 %215
  %vm217 = vcmask 56320
  %v219 = vsel %vm217, 0, %v216
  %vm221 = vcmp.lt.s32.totalorder %v179, 7
  %vm222 = vmand %vm190, %vm221
  %vm223 = vmpackc.low %vm222, %vm222
  %v224 = vsel %vm223, 65537, 0
  %v225 = vlaneseq
  %v226 = vshrl.u32 %v225, 7
  %v227 = vsub.s32 0, %v226
  %v228 = vrot.slane %v224, %v227
  %vm229 = vcmp.ne.s16.totalorder %v228, 0
  %v230 = vsel %vm229, %v219, 0
  %231 = vrot.lane.b32.xlu0 %v176, 1
  %v232 = vpop.permute.xlu0 %231
  %vm233 = vcmask 7168
  %v235 = vsel %vm233, 0, %v232
  %vm237 = vmpackc.low %vm191, %vm191
  %v238 = vsel %vm237, 65537, 0
  %v239 = vlaneseq
  %v240 = vshrl.u32 %v239, 7
  %v241 = vsub.s32 0, %v240
  %v242 = vrot.slane %v238, %v241
  %vm243 = vcmp.ne.s16.totalorder %v242, 0
  %v244 = vsel %vm243, %v235, 0
  %245 = vrot.lane.b32.xlu0 %v176, 127
  %v246 = vpop.permute.xlu0 %245
  %vm247 = vcmask 1039360
  %v249 = vsel %vm247, %v246, 0
  %vm251 = vmpackc.low %vm221, %vm221
  %v252 = vsel %vm251, 65537, 0
  %v253 = vlaneseq
  %v254 = vshrl.u32 %v253, 7
  %v255 = vsub.s32 0, %v254
  %v256 = vrot.slane %v252, %v255
  %vm257 = vcmp.ne.s16.totalorder %v256, 0
  %v258 = vsel %vm257, %v249, 0
  %259 = vrot.lane.b32.xlu0 %v176, 121
  %v260 = vpop.permute.xlu0 %259
  %vm261 = vcmask 990208
  %v263 = vsel %vm261, %v260, 0
  %vm265 = vcmp.lt.s32.totalorder %v181, 7
  %vm266 = vmand %vm265, %vm191
  %vm267 = vmpackc.low %vm266, %vm266
  %v268 = vsel %vm267, 65537, 0
  %v269 = vlaneseq
  %v270 = vshrl.u32 %v269, 7
  %v271 = vsub.s32 0, %v270
  %v272 = vrot.slane %v268, %v271
  %vm273 = vcmp.ne.s16.totalorder %v272, 0
  %v274 = vsel %vm273, %v263, 0
  %275 = vrot.lane.b32.xlu0 %v176, 120
  %v276 = vpop.permute.xlu0 %275
  %vm277 = vcmask 982016
  %v279 = vsel %vm277, %v276, 0
  %vm281 = vmpackc.low %vm265, %vm265
  %v282 = vsel %vm281, 65537, 0
  %v283 = vlaneseq
  %v284 = vshrl.u32 %v283, 7
  %v285 = vsub.s32 0, %v284
  %v286 = vrot.slane %v282, %v285
  %vm287 = vcmp.ne.s16.totalorder %v286, 0
  %v288 = vsel %vm287, %v279, 0
  %289 = vrot.lane.b32.xlu0 %v176, 119
  %v290 = vpop.permute.xlu0 %289
  %vm291 = vcmask 973824
  %v293 = vsel %vm291, %v290, 0
  %vm295 = vmand %vm265, %vm221
  %vm296 = vmpackc.low %vm295, %vm295
  %v297 = vsel %vm296, 65537, 0
  %v298 = vlaneseq
  %v299 = vshrl.u32 %v298, 7
  %v300 = vsub.s32 0, %v299
  %v301 = vrot.slane %v297, %v300
  %vm302 = vcmp.ne.s16.totalorder %v301, 0
  %v303 = vsel %vm302, %v293, 0
  %v304 = vld [vmem:[%s6] sm:$0xff]
  %v305 = vld [vmem:[%s6 + $0x8] sm:$0xff]
  %v306 = vld [vmem:[%s6 + $0x10] sm:$0xff]
  %v307 = vld [vmem:[%s6 + $0x18] sm:$0xff]
  %v308 = vld [vmem:[%s6 + $0x20] sm:$0xff]
  %v309 = vld [vmem:[%s6 + $0x28] sm:$0xff]
  %v310 = vld [vmem:[%s6 + $0x30] sm:$0xff]
  %v311 = vld [vmem:[%s6 + $0x38] sm:$0xff]
  %v312 = vld [vmem:[%s6 + $0x40] sm:$0xff]
  %v313 = vld [vmem:[%s6 + $0x48] sm:$0xff]
  %v314 = vld [vmem:[%s6 + $0x50] sm:$0xff]
  %v315 = vld [vmem:[%s2] sm:$0xff]
  %317 = vset.pattern.permute.xlu0 0
  %318 = vperm.xlu0 %317, %v304
  %v319 = vpop.permute.xlu0 %318
  %v322 = vunpack.c.l.b16 %v315
  %v323 = vunpack.c.h.b16 %v315
  %v324 = vpack.c.b16 %v322, %v322
  %v325 = vpack.c.b16 %v323, %v323
  %vm327 = vcmask 130048
  %v329 = vsel %vm327, %v325, 0
  %331 = vmatprep.subr.bf16.mxu0 0
  %332 = vmatpush1.bf16.msra.mxu0 %v200
  %333 = vmatprep.subr.bf16.mxu0 0
  %334 = vmatpush1.bf16.msra.mxu0 %v214
  %335 = vmatprep.subr.bf16.mxu0 0
  %336 = vmatpush1.bf16.msra.mxu0 %v230
  %337 = vmatprep.subr.bf16.mxu0 0
  %338 = vmatpush1.bf16.msra.mxu0 %v244
  %339 = vmatprep.subr.bf16.mxu0 0
  %340 = vmatpush1.bf16.msra.mxu0 %v176
  %341 = vmatprep.subr.bf16.mxu0 0
  %342 = vmatpush1.bf16.msra.mxu0 %v258
  %343 = vmatprep.subr.bf16.mxu0 0
  %344 = vmatpush1.bf16.msra.mxu0 %v274
  %345 = vmatprep.subr.bf16.mxu0 0
  %346 = vmatpush1.bf16.msra.mxu0 %v288
  %347 = vmatprep.subr.bf16.mxu0 0
  %348 = vmatpush1.bf16.msra.mxu0 %v303
  %349 = vmatprep.subr.bf16.mxu0 0
  %350 = vmatpush1.bf16.msra.mxu0 0
  %351 = vmatprep.subr.bf16.mxu0 0
  %352 = vmatpush1.bf16.msra.mxu0 0
  %353 = vmatprep.subr.bf16.mxu0 0
  %354 = vmatpush1.bf16.msra.mxu0 0
  %355 = vmatprep.subr.bf16.mxu0 0
  %356 = vmatpush1.bf16.msra.mxu0 0
  %357 = vmatprep.subr.bf16.mxu0 0
  %358 = vmatpush1.bf16.msra.mxu0 0
  %359 = vmatprep.subr.bf16.mxu0 0
  %360 = vmatpush1.bf16.msra.mxu0 0
  %361 = vmatprep.subr.bf16.mxu0 0
  %362 = vmatpush1.bf16.msra.mxu0 0
  %363 = vmatprep.mubr.bf16.mxu0 %v329
  %364 = vmatmul.mubr.bf16.gmra.mrb[0].mxu0 %v324
  %v365 = vpop.f32.mrb[0].mxu0
  %v366 = vadd.f32 %v319, %v365
  %v367 = vpop.f32.mrb[0].mxu0
  %v368 = vpop.f32.mrb[0].mxu0
  %v369 = vpop.f32.mrb[0].mxu0
  %370 = vdwg.mxu0
  %v371 = vmax.f32 %v366, 0.0
  %373 = vrot.lane.b32.xlu0 %v371, 127
  %v374 = vpop.permute.xlu0 %373
  %v376 = vsel %vm247, %v374, 0.0
  %v377 = vmax.f32 %v371, %v376
  %378 = vrot.lane.b32.xlu0 %v371, 120
  %v379 = vpop.permute.xlu0 %378
  %v381 = vsel %vm277, %v379, 0.0
  %382 = vrot.lane.b32.xlu0 %v371, 119
  %v383 = vpop.permute.xlu0 %382
  %v385 = vsel %vm291, %v383, 0.0
  %v386 = vmax.f32 %v381, %v385
  %v387 = vmax.f32 %v377, %v386
  %v388 = vpack.c.bf16 %v387, %v387
  %v389 = vld [vmem:[%s3] sm:$0xf]
  %v390 = vld [vmem:[%s3 + $0x4] sm:$0xf]
  %v391 = vld [vmem:[%s3 + $0x8] sm:$0xf]
  %v392 = vld [vmem:[%s3 + $0xc] sm:$0xf]
  %v393 = vld [vmem:[%s3 + $0x10] sm:$0xf]
  %v394 = vld [vmem:[%s3 + $0x14] sm:$0xf]
  %v395 = vld [vmem:[%s3 + $0x18] sm:$0xf]
  %v396 = vld [vmem:[%s3 + $0x1c] sm:$0xf]
  %v397 = vld [vmem:[%s3 + $0x20] sm:$0xf]
  %v398 = vld [vmem:[%s3 + $0x24] sm:$0xf]
  %v399 = vld [vmem:[%s3 + $0x28] sm:$0xf]
  %v400 = vld [vmem:[%s3 + $0x2c] sm:$0xf]
  %v401 = vld [vmem:[%s3 + $0x30] sm:$0xf]
  %v402 = vld [vmem:[%s3 + $0x34] sm:$0xf]
  %v403 = vld [vmem:[%s3 + $0x38] sm:$0xf]
  %v404 = vld [vmem:[%s3 + $0x3c] sm:$0xf]
  %v421 = vunpack.c.l.b16 %v389
  %v422 = vunpack.c.l.b16 %v390
  %v423 = vunpack.c.l.b16 %v391
  %v424 = vunpack.c.l.b16 %v392
  %v425 = vunpack.c.l.b16 %v393
  %v426 = vunpack.c.l.b16 %v394
  %v427 = vunpack.c.l.b16 %v395
  %v428 = vunpack.c.l.b16 %v396
  %v429 = vunpack.c.l.b16 %v397
  %v430 = vunpack.c.l.b16 %v398
  %v431 = vunpack.c.l.b16 %v399
  %v432 = vunpack.c.l.b16 %v400
  %v433 = vunpack.c.l.b16 %v401
  %v434 = vunpack.c.l.b16 %v402
  %v435 = vunpack.c.l.b16 %v403
  %v436 = vunpack.c.l.b16 %v404
  %v437 = vpack.c.b16 %v422, %v421
  %v438 = vpack.c.b16 %v424, %v423
  %v439 = vpack.c.b16 %v426, %v425
  %v440 = vpack.c.b16 %v428, %v427
  %v441 = vpack.c.b16 %v430, %v429
  %v442 = vpack.c.b16 %v432, %v431
  %v443 = vpack.c.b16 %v434, %v433
  %v444 = vpack.c.b16 %v436, %v435
  %453 = vmatprep.subr.bf16.mxu0 0
  %454 = vmatpush1.bf16.msra.mxu0 %v437
  %455 = vmatprep.subr.bf16.mxu0 0
  %456 = vmatpush1.bf16.msra.mxu0 %v438
  %457 = vmatprep.subr.bf16.mxu0 0
  %458 = vmatpush1.bf16.msra.mxu0 %v439
  %459 = vmatprep.subr.bf16.mxu0 0
  %460 = vmatpush1.bf16.msra.mxu0 %v440
  %461 = vmatprep.subr.bf16.mxu0 0
  %462 = vmatpush1.bf16.msra.mxu0 %v441
  %463 = vmatprep.subr.bf16.mxu0 0
  %464 = vmatpush1.bf16.msra.mxu0 %v442
  %465 = vmatprep.subr.bf16.mxu0 0
  %466 = vmatpush1.bf16.msra.mxu0 %v443
  %467 = vmatprep.subr.bf16.mxu0 0
  %468 = vmatpush1.bf16.msra.mxu0 %v444
  %469 = vmatprep.subr.bf16.mxu0 0
  %470 = vmatpush1.bf16.msra.mxu0 0
  %471 = vmatprep.subr.bf16.mxu0 0
  %472 = vmatpush1.bf16.msra.mxu0 0
  %473 = vmatprep.subr.bf16.mxu0 0
  %474 = vmatpush1.bf16.msra.mxu0 0
  %475 = vmatprep.subr.bf16.mxu0 0
  %476 = vmatpush1.bf16.msra.mxu0 0
  %477 = vmatprep.subr.bf16.mxu0 0
  %478 = vmatpush1.bf16.msra.mxu0 0
  %479 = vmatprep.subr.bf16.mxu0 0
  %480 = vmatpush1.bf16.msra.mxu0 0
  %481 = vmatprep.subr.bf16.mxu0 0
  %482 = vmatpush1.bf16.msra.mxu0 0
  %483 = vmatprep.subr.bf16.mxu0 0
  %484 = vmatpush1.bf16.msra.mxu0 0
  %485 = vmatprep.mubr.bf16.mxu0 0
  %486 = vmatmul.mubr.bf16.gmra.mrb[0].mxu0 %v388
  %v487 = vpop.f32.mrb[0].mxu0
  %v488 = vadd.f32 0.0, %v487
  %v489 = vpop.f32.mrb[0].mxu0
  %v490 = vpop.f32.mrb[0].mxu0
  %v491 = vpop.f32.mrb[0].mxu0
  %492 = vdwg.mxu0
  %v493 = vld [vmem:[%s4] sm:$0xf]
  %v494 = vld [vmem:[%s4 + $0x4] sm:$0xf]
  %v495 = vld [vmem:[%s4 + $0x8] sm:$0xf]
  %v496 = vld [vmem:[%s4 + $0xc] sm:$0xf]
  %v497 = vld [vmem:[%s4 + $0x10] sm:$0xf]
  %v498 = vld [vmem:[%s4 + $0x14] sm:$0xf]
  %v499 = vld [vmem:[%s4 + $0x18] sm:$0xf]
  %v500 = vld [vmem:[%s4 + $0x1c] sm:$0xf]
  %v501 = vpack.c.bf16 %v488, %v488
  %503 = vset.pattern.permute.xlu0 0
  %504 = vperm.xlu0 %503, %v305
  %v505 = vpop.permute.xlu0 %504
  %508 = vset.pattern.permute.xlu0 0
  %509 = vperm.xlu0 %508, %v306
  %v510 = vpop.permute.xlu0 %509
  %513 = vset.pattern.permute.xlu0 0
  %514 = vperm.xlu0 %513, %v307
  %v515 = vpop.permute.xlu0 %514
  %518 = vset.pattern.permute.xlu0 0
  %519 = vperm.xlu0 %518, %v308
  %v520 = vpop.permute.xlu0 %519
  %523 = vset.pattern.permute.xlu0 0
  %524 = vperm.xlu0 %523, %v309
  %v525 = vpop.permute.xlu0 %524
  %528 = vset.pattern.permute.xlu0 0
  %529 = vperm.xlu0 %528, %v310
  %v530 = vpop.permute.xlu0 %529
  %533 = vset.pattern.permute.xlu0 0
  %534 = vperm.xlu0 %533, %v311
  %v535 = vpop.permute.xlu0 %534
  %538 = vset.pattern.permute.xlu0 0
  %539 = vperm.xlu0 %538, %v312
  %v540 = vpop.permute.xlu0 %539
  %v550 = vunpack.c.l.b16 %v493
  %v551 = vunpack.c.l.b16 %v494
  %v552 = vunpack.c.l.b16 %v495
  %v553 = vunpack.c.l.b16 %v496
  %v554 = vunpack.c.l.b16 %v497
  %v555 = vunpack.c.l.b16 %v498
  %v556 = vunpack.c.l.b16 %v499
  %v557 = vunpack.c.l.b16 %v500
  %v558 = vpack.c.b16 %v551, %v550
  %v559 = vpack.c.b16 %v553, %v552
  %v560 = vpack.c.b16 %v555, %v554
  %v561 = vpack.c.b16 %v557, %v556
  %v563 = vsel %vm203, %v558, 0
  %v566 = vsel %vm203, %v559, 0
  %v569 = vsel %vm203, %v560, 0
  %v572 = vsel %vm203, %v561, 0
  %vm574 = vcmask 1043456
  %v576 = vsel %vm574, %v501, 0
  %578 = vmatprep.subr.bf16.mxu0 0
  %579 = vmatpush1.bf16.msra.mxu0 %v576
  %580 = vmatprep.subr.bf16.mxu0 0
  %581 = vmatpush1.bf16.msra.mxu0 0
  %582 = vmatprep.subr.bf16.mxu0 0
  %583 = vmatpush1.bf16.msra.mxu0 0
  %584 = vmatprep.subr.bf16.mxu0 0
  %585 = vmatpush1.bf16.msra.mxu0 0
  %586 = vmatprep.subr.bf16.mxu0 0
  %587 = vmatpush1.bf16.msra.mxu0 0
  %588 = vmatprep.subr.bf16.mxu0 0
  %589 = vmatpush1.bf16.msra.mxu0 0
  %590 = vmatprep.subr.bf16.mxu0 0
  %591 = vmatpush1.bf16.msra.mxu0 0
  %592 = vmatprep.subr.bf16.mxu0 0
  %593 = vmatpush1.bf16.msra.mxu0 0
  %594 = vmatprep.subr.bf16.mxu0 0
  %595 = vmatpush1.bf16.msra.mxu0 0
  %596 = vmatprep.subr.bf16.mxu0 0
  %597 = vmatpush1.bf16.msra.mxu0 0
  %598 = vmatprep.subr.bf16.mxu0 0
  %599 = vmatpush1.bf16.msra.mxu0 0
  %600 = vmatprep.subr.bf16.mxu0 0
  %601 = vmatpush1.bf16.msra.mxu0 0
  %602 = vmatprep.subr.bf16.mxu0 0
  %603 = vmatpush1.bf16.msra.mxu0 0
  %604 = vmatprep.subr.bf16.mxu0 0
  %605 = vmatpush1.bf16.msra.mxu0 0
  %606 = vmatprep.subr.bf16.mxu0 0
  %607 = vmatpush1.bf16.msra.mxu0 0
  %608 = vmatprep.subr.bf16.mxu0 0
  %609 = vmatpush1.bf16.msra.mxu0 0
  %610 = vmatprep.mubr.bf16.mxu0 0
  %611 = vmatmul.mubr.bf16.gmra.mrb[0].mxu0 %v563
  %v612 = vpop.f32.mrb[0].mxu0
  %v613 = vadd.f32 %v505, %v612
  %v614 = vpop.f32.mrb[0].mxu0
  %v615 = vpop.f32.mrb[0].mxu0
  %v616 = vadd.f32 %v510, %v615
  %v617 = vpop.f32.mrb[0].mxu0
  %618 = vmatprep.mubr.bf16.mxu0 0
  %619 = vmatmul.mubr.bf16.gmra.mrb[0].mxu0 %v566
  %v620 = vpop.f32.mrb[0].mxu0
  %v621 = vadd.f32 %v515, %v620
  %v622 = vpop.f32.mrb[0].mxu0
  %v623 = vpop.f32.mrb[0].mxu0
  %v624 = vadd.f32 %v520, %v623
  %v625 = vpop.f32.mrb[0].mxu0
  %626 = vmatprep.mubr.bf16.mxu0 0
  %627 = vmatmul.mubr.bf16.gmra.mrb[0].mxu0 %v569
  %v628 = vpop.f32.mrb[0].mxu0
  %v629 = vadd.f32 %v525, %v628
  %v630 = vpop.f32.mrb[0].mxu0
  %v631 = vpop.f32.mrb[0].mxu0
  %v632 = vadd.f32 %v530, %v631
  %v633 = vpop.f32.mrb[0].mxu0
  %634 = vmatprep.mubr.bf16.mxu0 0
  %635 = vmatmul.mubr.bf16.gmra.mrb[0].mxu0 %v572
  %v636 = vpop.f32.mrb[0].mxu0
  %v637 = vadd.f32 %v535, %v636
  %v638 = vpop.f32.mrb[0].mxu0
  %v639 = vpop.f32.mrb[0].mxu0
  %v640 = vadd.f32 %v540, %v639
  %v641 = vpop.f32.mrb[0].mxu0
  %642 = vdwg.mxu0
  %v643 = vmax.f32 %v613, 0.0
  %v644 = vmax.f32 %v616, 0.0
  %v645 = vmax.f32 %v621, 0.0
  %v646 = vmax.f32 %v624, 0.0
  %v647 = vmax.f32 %v629, 0.0
  %v648 = vmax.f32 %v632, 0.0
  %v649 = vmax.f32 %v637, 0.0
  %v650 = vmax.f32 %v640, 0.0
  %v651 = vld [vmem:[%s5] sm:$0xf]
  %v652 = vld [vmem:[%s5 + $0x4] sm:$0xf]
  %v653 = vpack.c.bf16 %v644, %v643
  %v654 = vpack.c.bf16 %v646, %v645
  %v655 = vpack.c.bf16 %v648, %v647
  %v656 = vpack.c.bf16 %v650, %v649
  %658 = vset.pattern.permute.xlu0 0
  %659 = vperm.xlu0 %658, %v313
  %v660 = vpop.permute.xlu0 %659
  %663 = vset.pattern.permute.xlu0 0
  %664 = vperm.xlu0 %663, %v314
  %v665 = vpop.permute.xlu0 %664
  %v669 = vunpack.c.l.b16 %v651
  %v670 = vunpack.c.l.b16 %v652
  %v671 = vpack.c.b16 %v670, %v669
  %vm672 = vcmask 523264
  %v674 = vsel %vm672, %v671, 0
  %676 = vmatprep.subr.bf16.mxu0 0
  %677 = vmatpush1.bf16.msra.mxu0 %v653
  %678 = vmatprep.subr.bf16.mxu0 0
  %679 = vmatpush1.bf16.msra.mxu0 %v654
  %680 = vmatprep.subr.bf16.mxu0 0
  %681 = vmatpush1.bf16.msra.mxu0 %v655
  %682 = vmatprep.subr.bf16.mxu0 0
  %683 = vmatpush1.bf16.msra.mxu0 %v656
  %684 = vmatprep.subr.bf16.mxu0 0
  %685 = vmatpush1.bf16.msra.mxu0 0
  %686 = vmatprep.subr.bf16.mxu0 0
  %687 = vmatpush1.bf16.msra.mxu0 0
  %688 = vmatprep.subr.bf16.mxu0 0
  %689 = vmatpush1.bf16.msra.mxu0 0
  %690 = vmatprep.subr.bf16.mxu0 0
  %691 = vmatpush1.bf16.msra.mxu0 0
  %692 = vmatprep.subr.bf16.mxu0 0
  %693 = vmatpush1.bf16.msra.mxu0 0
  %694 = vmatprep.subr.bf16.mxu0 0
  %695 = vmatpush1.bf16.msra.mxu0 0
  %696 = vmatprep.subr.bf16.mxu0 0
  %697 = vmatpush1.bf16.msra.mxu0 0
  %698 = vmatprep.subr.bf16.mxu0 0
  %699 = vmatpush1.bf16.msra.mxu0 0
  %700 = vmatprep.subr.bf16.mxu0 0
  %701 = vmatpush1.bf16.msra.mxu0 0
  %702 = vmatprep.subr.bf16.mxu0 0
  %703 = vmatpush1.bf16.msra.mxu0 0
  %704 = vmatprep.subr.bf16.mxu0 0
  %705 = vmatpush1.bf16.msra.mxu0 0
  %706 = vmatprep.subr.bf16.mxu0 0
  %707 = vmatpush1.bf16.msra.mxu0 0
  %708 = vmatprep.mubr.bf16.mxu0 0
  %709 = vmatmul.mubr.bf16.gmra.mrb[0].mxu0 %v674
  %v710 = vpop.f32.mrb[0].mxu0
  %v711 = vadd.f32 %v660, %v710
  %v712 = vpop.f32.mrb[0].mxu0
  %v713 = vpop.f32.mrb[0].mxu0
  %v714 = vadd.f32 %v665, %v713
  %v715 = vpop.f32.mrb[0].mxu0
  %716 = vdwg.mxu0
  %v717 = vsub.f32 0.0, %v711
  %v718 = vsub.f32 0.0, %v714
  %v719 = vmul.f32 %v717, 1.442695
  %v720 = vpow.pop %v719
  %v721 = vmul.f32 %v718, 1.442695
  %v722 = vpow.pop %v721
  %v723 = vadd.f32 %v720, 1.0
  %v724 = vadd.f32 %v722, 1.0
  %v725 = vrcp.pop %v723
  %v726 = vrcp.pop %v724
  %vm727 = vcmask 261120
  %728 = vst.msk [vmem:[%s7] sm:$0xff] %vm727, %v725
  %729 = vst.msk [vmem:[%s7 + $0x8] sm:$0xff] %vm727, %v726
  // Predicated region
  $region30: #{conv_autoencoder_forward.1} parent=0 // pred_check
    _
  $region31: #{conv_autoencoder_forward.1} parent=0 // pred_check_branch
    %731 = sbr.rel (0) target = $region33
  $region32: #{conv_autoencoder_forward.1} parent=0 // pred_region
    _
  $region33: #{conv_autoencoder_forward.1} parent=0 // pred_fallthru
    _
  // Predicated region
  $region34: #{conv_autoencoder_forward.1} parent=0 // pred_check
    _
  $region35: #{conv_autoencoder_forward.1} parent=0 // pred_check_branch
    %733 = sbr.rel (0) target = $region37
  $region36: #{conv_autoencoder_forward.1} parent=0 // pred_region
    _
  $region37: #{conv_autoencoder_forward.1} parent=0 // pred_fallthru
    _

</llo_original>
